<compile_context>
chip_gen: v5e
topology: v5e:2x2
jax: 0.10.0
libtpu: 0.0.40
codegen_flags: <defaults>
</compile_context>

<pallas_src>
import jax
import jax.numpy as jnp
from jax.experimental import pallas as pl
from jax.experimental.pallas import tpu as pltpu


def _make_swmse_kernel(block_rows, rows):
    """Build the per-row-block kernel (block_rows/rows are static)."""
    need_row_mask = (rows % block_rows) != 0

    def kernel(pred_ref, tgt_ref, out_ref):
        if need_row_mask:
            # Rows past `rows` in the last block are out-of-bounds reads with
            # unspecified contents; mask them to 0 BEFORE exp / diff / sq.
            row0 = pl.program_id(0) * block_rows
            rid = row0 + jax.lax.broadcasted_iota(jnp.int32, (block_rows, 1), 0)
            rmask = rid < rows

        def masked(x):
            return jnp.where(rmask, x, 0.0) if need_row_mask else x

        # ---- Pass 1: softmax weights from target only.  Keeping pred / sq
        # out of the live range of the lane reductions shrinks vreg pressure
        # and spill scratch (lets the wrapper stream bigger tiles). ----
        t = masked(tgt_ref[...].astype(jnp.float32))
        m = jnp.max(t, axis=-1, keepdims=True)
        e = jnp.exp(t - m)
        denom = jnp.sum(e, axis=-1, keepdims=True)
        # Reciprocal on the EUP + broadcast VALU multiply instead of a divide.
        w = e * pl.reciprocal(denom, approx=False)

        # ---- Pass 2: re-read target, load pred, squared error.  Masked rows
        # contribute exactly 0 (sq == 0, finite w). ----
        diff = (masked(pred_ref[...].astype(jnp.float32))
                - masked(tgt_ref[...].astype(jnp.float32)))
        # w*sq + sq == (w + 1) * sq  (shares the same 1/N normalization).
        contrib = (w + 1.0) * (diff * diff)

        # Sublane-only reduce; keep the lane axis dense for an unmasked store.
        partial = jnp.sum(contrib, axis=0)  # (cols,)
        out_ref[...] = partial.reshape(out_ref.shape)

    return kernel


def _pick_block_rows_and_vmem(rows, cols, pred_itemsize, tgt_itemsize,
                              block_rows_override=None):
    """Byte-capped, generation-aware row-block size and scoped-VMEM limit."""
    queried = True
    try:
        vmem_cap = int(pltpu.get_tpu_info().vmem_capacity_bytes)
    except Exception:
        vmem_cap = 64 * 1024 * 1024  # conservative fallback
        queried = False

    small_vmem = vmem_cap <= 64 * 1024 * 1024  # v7x-class part

    in_itemsize_sum = pred_itemsize + tgt_itemsize
    itemsize = max(pred_itemsize, tgt_itemsize)

    # VMEM per tile-row: 2 pipeline buffers per input + ~4 f32 intermediates
    # per element (post live-range reorder).
    per_row_bytes = 2 * in_itemsize_sum * cols + 4 * 4 * cols
    budget = (vmem_cap * 85) // 100

    rows8 = pl.cdiv(rows, 8) * 8

    if block_rows_override is not None:
        block_rows = max(8, (int(block_rows_override) // 8) * 8)
    else:
        # Byte-based target so each DMA step is multi-MiB (85%+ of HBM
        # roofline needs multi-MiB tiles; per-step overhead is ~0.35 us).
        target_in_bytes = (7 if small_vmem else 16) * 1024 * 1024
        rows_target = target_in_bytes // max(1, cols * itemsize)
        rows_budget = budget // per_row_bytes
        block_rows = max(8, (min(rows_target, rows_budget) // 8) * 8)
        block_rows = min(block_rows, rows8)  # never taller than the data

    # TODO(synk): for huge cols even block_rows=8 may exceed the budget; a
    # flash-style column-tiled online-softmax fallback is needed for that.

    needed = block_rows * per_row_bytes + 2 * 2 * cols * 4 + (1 << 20)
    vmem_limit = int(min(vmem_cap, max(needed + (4 << 20), 32 * 1024 * 1024)))
    return block_rows, vmem_limit, vmem_cap, queried


def softmax_weighted_mse_loss(pred, target, block_rows_override=None):
    """JAX/Pallas equivalent of SoftmaxWeightedMSELoss.forward."""
    B, R, T, P = target.shape
    rows = B * R
    cols = T * P
    n_elems = rows * cols

    # Stream inputs in their native dtype; cast to f32 inside the kernel.
    pred2d = pred.reshape(rows, cols)
    tgt2d = target.reshape(rows, cols)

    block_rows, vmem_limit, vmem_cap, queried = _pick_block_rows_and_vmem(
        rows, cols,
        jnp.dtype(pred2d.dtype).itemsize, jnp.dtype(tgt2d.dtype).itemsize,
        block_rows_override)

    num_blocks = pl.cdiv(rows, block_rows)
    kernel = _make_swmse_kernel(block_rows, rows)

    def build(dim_semantics):
        return pl.pallas_call(
            kernel,
            out_shape=jax.ShapeDtypeStruct((num_blocks, 1, cols), jnp.float32),
            grid_spec=pltpu.PrefetchScalarGridSpec(
                num_scalar_prefetch=0,
                grid=(num_blocks,),
                in_specs=[
                    pl.BlockSpec((block_rows, cols), lambda i: (i, 0)),
                    pl.BlockSpec((block_rows, cols), lambda i: (i, 0)),
                ],
                out_specs=pl.BlockSpec((1, 1, cols), lambda i: (i, 0, 0)),
            ),
            compiler_params=pltpu.CompilerParams(
                dimension_semantics=dim_semantics,
                vmem_limit_bytes=vmem_limit,
            ),
        )

    # Each grid step owns a distinct output block -> no serialization.  On
    # 64 MiB-VMEM parts (v7x, 2 TensorCores) explicitly request CORE_PARALLEL
    # so the HBM-bound stream is split across both cores; fall back to plain
    # "parallel" if the compiler rejects it.
    candidates = [("parallel",)]
    if queried and vmem_cap <= 64 * 1024 * 1024 and num_blocks > 1:
        candidates.insert(0, (pltpu.CORE_PARALLEL,))

    if len(candidates) == 1:
        partials = build(candidates[0])(pred2d, tgt2d)
    else:
        partials = None
        last_err = None
        for sem in candidates:
            try:
                partials = jax.block_until_ready(build(sem)(pred2d, tgt2d))
                break
            except Exception as err:  # fall back to the next semantics
                last_err = err
        if partials is None:
            raise last_err

    return jnp.sum(partials) / jnp.float32(n_elems)


def _reference(pred, target):
    B, R, T, P = target.shape
    t32 = target.astype(jnp.float32)
    p32 = pred.astype(jnp.float32)
    w = jax.nn.softmax(t32.reshape(B * R, -1), axis=1).reshape(B, R, T, P)
    sq = (p32 - t32) ** 2
    weighted = (w * sq / (B * R * T * P)).sum()
    mse = jnp.mean(sq)
    return weighted + mse


if __name__ == "__main__":
    key = jax.random.PRNGKey(0)
    k1, k2, k3, k4, k5, k6, k7, k8 = jax.random.split(key, 8)

    # Test 1: small f32 shape consistent with the module's (B, R, T, P) layout.
    B, R, T, P = 2, 4, 8, 16
    pred = jax.random.normal(k1, (B, R, T, P), dtype=jnp.float32)
    target = jax.random.normal(k2, (B, R, T, P), dtype=jnp.float32)
    loss = jax.block_until_ready(softmax_weighted_mse_loss(pred, target))
    ref = _reference(pred, target)
    assert jnp.allclose(loss, ref, rtol=1e-5, atol=1e-6), (loss, ref)

    # Test 2: rows (B*R) not a multiple of 8 -> in-kernel row-mask path
    # (no wrapper-side jnp.pad / HBM copy anymore).
    B2, R2, T2, P2 = 3, 3, 8, 16
    pred2 = jax.random.normal(k3, (B2, R2, T2, P2), dtype=jnp.float32)
    target2 = jax.random.normal(k4, (B2, R2, T2, P2), dtype=jnp.float32)
    loss2 = jax.block_until_ready(softmax_weighted_mse_loss(pred2, target2))
    ref2 = _reference(pred2, target2)
    assert jnp.allclose(loss2, ref2, rtol=1e-5, atol=1e-6), (loss2, ref2)

    # Test 3: bf16 inputs streamed natively (halves HBM traffic), f32 math inside.
    pred3 = jax.random.normal(k5, (B, R, T, P), dtype=jnp.bfloat16)
    target3 = jax.random.normal(k6, (B, R, T, P), dtype=jnp.bfloat16)
    loss3 = jax.block_until_ready(softmax_weighted_mse_loss(pred3, target3))
    ref3 = _reference(pred3, target3)
    assert jnp.allclose(loss3, ref3, rtol=1e-5, atol=1e-5), (loss3, ref3)

    # Test 4: multi-block grid + ragged tail inside the last block (block size
    # forced small so the tiny test shape spans several grid steps).
    B4, R4, T4, P4 = 5, 5, 8, 16  # rows = 25, cols = 128
    pred4 = jax.random.normal(k7, (B4, R4, T4, P4), dtype=jnp.float32)
    target4 = jax.random.normal(k8, (B4, R4, T4, P4), dtype=jnp.float32)
    loss4 = jax.block_until_ready(
        softmax_weighted_mse_loss(pred4, target4, block_rows_override=8))
    ref4 = _reference(pred4, target4)
    assert jnp.allclose(loss4, ref4, rtol=1e-5, atol=1e-6), (loss4, ref4)

    print("KERNEL_OK")
</pallas_src>

<mosaic_0001>
module attributes {stable_mosaic.version = 11 : i64} {
  func.func @kernel(%arg0: i32, %arg1: memref<8x128xf32, #tpu.memory_space<vmem>>, %arg2: memref<8x128xf32, #tpu.memory_space<vmem>>, %arg3: memref<1x1x128xf32, #tpu.memory_space<vmem>>) attributes {dimension_semantics = [#tpu.dimension_semantics<parallel>], iteration_bounds = array<i64: 1>, scalar_prefetch = 0 : i64, scratch_operands = 0 : i64, tpu.core_type = #tpu.core_type<tc>, window_params = [{transform_indices = @transform_0, window_bounds = array<i64: 8, 128>}, {transform_indices = @transform_1, window_bounds = array<i64: 8, 128>}, {transform_indices = @transform_2, window_bounds = array<i64: 1, 1, 128>}]} {
    %c0 = arith.constant 0 : index
    %c0_0 = arith.constant 0 : index
    %0 = vector.load %arg2[%c0, %c0_0] : memref<8x128xf32, #tpu.memory_space<vmem>>, vector<8x128xf32>
    %cst = arith.constant dense<0xFF800000> : vector<8xf32>
    %1 = vector.multi_reduction <maximumf>, %0, %cst [1] : vector<8x128xf32> to vector<8xf32>
    %2 = vector.shape_cast %1 : vector<8xf32> to vector<8x1xf32>
    %3 = vector.broadcast %2 : vector<8x1xf32> to vector<8x128xf32>
    %4 = arith.subf %0, %3 : vector<8x128xf32>
    %5 = math.exp %4 : vector<8x128xf32>
    %cst_1 = arith.constant dense<0.000000e+00> : vector<8xf32>
    %6 = vector.multi_reduction <add>, %5, %cst_1 [1] : vector<8x128xf32> to vector<8xf32>
    %7 = vector.shape_cast %6 : vector<8xf32> to vector<8x1xf32>
    %8 = tpu.reciprocal %7 : vector<8x1xf32> -> vector<8x1xf32>
    %9 = vector.broadcast %8 : vector<8x1xf32> to vector<8x128xf32>
    %10 = arith.mulf %5, %9 : vector<8x128xf32>
    %c0_2 = arith.constant 0 : index
    %c0_3 = arith.constant 0 : index
    %11 = vector.load %arg1[%c0_2, %c0_3] : memref<8x128xf32, #tpu.memory_space<vmem>>, vector<8x128xf32>
    %c0_4 = arith.constant 0 : index
    %c0_5 = arith.constant 0 : index
    %12 = vector.load %arg2[%c0_4, %c0_5] : memref<8x128xf32, #tpu.memory_space<vmem>>, vector<8x128xf32>
    %13 = arith.subf %11, %12 : vector<8x128xf32>
    %cst_6 = arith.constant 1.000000e+00 : f32
    %14 = vector.broadcast %cst_6 : f32 to vector<8x128xf32>
    %15 = arith.addf %10, %14 : vector<8x128xf32>
    %16 = arith.mulf %13, %13 : vector<8x128xf32>
    %17 = arith.mulf %15, %16 : vector<8x128xf32>
    %cst_7 = arith.constant dense<0.000000e+00> : vector<128xf32>
    %18 = vector.multi_reduction <add>, %17, %cst_7 [0] : vector<8x128xf32> to vector<128xf32>
    %19 = vector.shape_cast %18 : vector<128xf32> to vector<1x1x128xf32>
    %c0_8 = arith.constant 0 : index
    %c0_9 = arith.constant 0 : index
    %c0_10 = arith.constant 0 : index
    %20 = vector.load %arg3[%c0_8, %c0_9, %c0_10] : memref<1x1x128xf32, #tpu.memory_space<vmem>>, vector<1x1x128xf32>
    tpu.vector_store %arg3[%c0_8, %c0_9, %c0_10], %19 {strides = array<i32>} : memref<1x1x128xf32, #tpu.memory_space<vmem>>, vector<1x1x128xf32>,
    return
  }
  func.func @transform_0(%arg0: i32) -> (i32, i32) {
    %c0_i32 = arith.constant 0 : i32
    %c0_i32_0 = arith.constant 0 : i32
    return %arg0, %c0_i32 : i32, i32
  }
  func.func @transform_1(%arg0: i32) -> (i32, i32) {
    %c0_i32 = arith.constant 0 : i32
    %c0_i32_0 = arith.constant 0 : i32
    return %arg0, %c0_i32 : i32, i32
  }
  func.func @transform_2(%arg0: i32) -> (i32, i32, i32) {
    %c0_i32 = arith.constant 0 : i32
    %c0_i32_0 = arith.constant 0 : i32
    %c0_i32_1 = arith.constant 0 : i32
    return %arg0, %c0_i32, %c0_i32_0 : i32, i32, i32
  }
}

</mosaic_0001>

<llo_original>
// kernel: tpu_custom_call.1
$region0: #{tpu_custom_call.1}
  #allocation0 [shape = 'u32[]', space=smem, size = 0x4, offset = 0x4, fixed_abs, tag = 'smem constant byte address 0x4 - core index']
  #allocation1 [shape = 'u32[72,128]{1,0:T(1,128)}', space=vmem, size = 0x9000, scoped, tag = 'internal scratch']
  %s0 = inlined_call_operand.hbm [shape: f32[8,128], index: 0, kind: input, shape index: {}]
  %s1 = inlined_call_operand.hbm [shape: f32[8,128], index: 1, kind: input, shape index: {}]
  %s2 = inlined_call_operand.hbm [shape: f32[1,1,128], index: 2, kind: output, shape index: {}]
  %s3 = sld [smem:[#allocation0]]
  $region26: #{tpu_custom_call.1} parent=0
    _
  %s5 = ssub.s32 1, %s3
  %s6 = scalar_select 0, %s5, %s3
  $region1: #{tpu_custom_call.1} parent=0
    #allocation2 [shape = 'u8[4096]{0}', space=vmem, size = 0x1000, scoped, tag = 'input window, operand 0, single buffered']
    #allocation3 [shape = 's32[1]{0}', space=sflag, size = 0x4, scoped, tag = 'scoped memory for tpu_custom_call.1']
    #allocation4 [shape = 's32[1]{0}', space=sflag, size = 0x4, scoped, tag = 'scoped memory for tpu_custom_call.1']
    #allocation5 [shape = 'u8[4096]{0}', space=vmem, size = 0x1000, scoped, tag = 'input window, operand 1, single buffered']
    #allocation6 [shape = 's32[1]{0}', space=sflag, size = 0x4, scoped, tag = 'scoped memory for tpu_custom_call.1']
    #allocation7 [shape = 'u8[512]{0}', space=vmem, size = 0x400, scoped, tag = 'output window, operand 0, single buffered']
    %7 = vsyncpa [#allocation3], 0
    %8 = vsyncpa [#allocation6], 0
    %9 = vsyncpa [#allocation4], 0
    // Predicated region
    $region2: #{tpu_custom_call.1} parent=1 // pred_check
      _
    $region3: #{tpu_custom_call.1} parent=1 // pred_check_branch
      %11 = sbr.rel (0) target = $region5
    $region4: #{tpu_custom_call.1} parent=1 // pred_region
      %13 = vsyncadd [#allocation3], 0
      %s15 = sshll.u32 %s0, 4
      %s16 = int_to_ptr.hbm [resolvable:$true] %s15
      %s17 = sshll.u32 [#allocation2], 4
      %s18 = int_to_ptr.vmem [resolvable:$true] %s17
      %20 = dma.hbm_to_vmem [thread:$0]  %s16, 128, %s18, [#allocation3]
    $region5: #{tpu_custom_call.1} parent=1 // pred_fallthru
      _
    // Predicated region
    $region6: #{tpu_custom_call.1} parent=1 // pred_check
      _
    $region7: #{tpu_custom_call.1} parent=1 // pred_check_branch
      %22 = sbr.rel (0) target = $region9
    $region8: #{tpu_custom_call.1} parent=1 // pred_region
      %24 = vsyncadd [#allocation6], 0
      %s26 = sshll.u32 %s1, 4
      %s27 = int_to_ptr.hbm [resolvable:$true] %s26
      %s28 = sshll.u32 [#allocation5], 4
      %s29 = int_to_ptr.vmem [resolvable:$true] %s28
      %31 = dma.hbm_to_vmem [thread:$0]  %s27, 128, %s29, [#allocation6]
    $region9: #{tpu_custom_call.1} parent=1 // pred_fallthru
      _
    // Predicated region
    $region10: #{tpu_custom_call.1} parent=1 // pred_check
      _
    $region11: #{tpu_custom_call.1} parent=1 // pred_check_branch
      %33 = sbr.rel (0) target = $region13
    $region12: #{tpu_custom_call.1} parent=1 // pred_region
      %35 = dma.done [#allocation3], 128
    $region13: #{tpu_custom_call.1} parent=1 // pred_fallthru
      _
    // Predicated region
    $region14: #{tpu_custom_call.1} parent=1 // pred_check
      _
    $region15: #{tpu_custom_call.1} parent=1 // pred_check_branch
      %37 = sbr.rel (0) target = $region17
    $region16: #{tpu_custom_call.1} parent=1 // pred_region
      %39 = dma.done [#allocation6], 128
    $region17: #{tpu_custom_call.1} parent=1 // pred_fallthru
      _
    %v40 = vld [vmem:[#allocation5] sm:$0xff]
    %41 = vmax.xlane.f32.xlu0 %v40
    %v42 = vpop.xlane.xlu0 %41
    %v43 = vsub.f32 %v40, %v42
    %v44 = vmul.f32 %v43, 1.442695
    %v45 = vpow.pop %v44
    %46 = vadd.xlane.f32.xlu0 %v45
    %v47 = vpop.xlane.xlu0 %46
    %v48 = vrcp.pop %v47
    %v49 = vmul.f32 %v47, %v48
    %v50 = vsub.f32 1.0, %v49
    %v51 = vmul.f32 %v48, %v50
    %v52 = vadd.f32 %v48, %v51
    %vm53 = vweird.f32 %v47
    %vm54 = vweird.f32 %v48
    %vm55 = vmor %vm53, %vm54
    %v56 = vsel %vm55, %v48, %v52
    %v57 = vand.u32 2147483647, %v47
    %vm58 = vcmp.eq.f32.partialorder %v57, 8.507059e+37
    %v59 = vand.u32 %v47, 2147483648
    %v60 = vor.u32 1.1754944e-38, %v59
    %v61 = vsel %vm58, %v60, %v56
    %v62 = vmul.f32 %v45, %v61
    %v63 = vld [vmem:[#allocation2] sm:$0xff]
    %v64 = vsub.f32 %v63, %v40
    %v65 = vadd.f32 %v62, 1.0
    %v66 = vmul.f32 %v64, %v64
    %v67 = vmul.f32 %v65, %v66
    %v68 = vrot.slane %v67, 4
    %v69 = vadd.f32 %v67, %v68
    %v70 = vrot.slane %v69, 2
    %v71 = vadd.f32 %v69, %v70
    %v72 = vrot.slane %v71, 1
    %v73 = vadd.f32 %v71, %v72
    %74 = vst [vmem:[#allocation7] sm:$0x1] %v73
    // Predicated region
    $region18: #{tpu_custom_call.1} parent=1 // pred_check
      _
    $region19: #{tpu_custom_call.1} parent=1 // pred_check_branch
      %76 = sbr.rel (0) target = $region21
    $region20: #{tpu_custom_call.1} parent=1 // pred_region
      %78 = vsyncadd [#allocation4], 0
      %s80 = sshll.u32 [#allocation7], 4
      %s81 = int_to_ptr.vmem [resolvable:$true] %s80
      %s82 = sshll.u32 %s2, 4
      %s83 = int_to_ptr.hbm [resolvable:$true] %s82
      %85 = dma.vmem_to_hbm [thread:$0]  %s81, 16, %s83, [#allocation4]
    $region21: #{tpu_custom_call.1} parent=1 // pred_fallthru
      _
    // Predicated region
    $region22: #{tpu_custom_call.1} parent=1 // pred_check
      _
    $region23: #{tpu_custom_call.1} parent=1 // pred_check_branch
      %87 = sbr.rel (0) target = $region25
    $region24: #{tpu_custom_call.1} parent=1 // pred_region
      %89 = dma.done [#allocation4], 16
    $region25: #{tpu_custom_call.1} parent=1 // pred_fallthru
      _
    %90 = vsyncpa [#allocation3], 1
    %91 = vsyncpa [#allocation6], 1
    %92 = vsyncpa [#allocation4], 1

</llo_original>
